<compile_context>
chip_gen: v6e
topology: v6e:2x2x1
jax: 0.10.0
libtpu: 0.0.40
codegen_flags: <defaults>
</compile_context>

<pallas_src>
from collections import OrderedDict

import numpy as np
import jax
import jax.numpy as jnp
from jax.experimental import pallas as pl
from jax.experimental.pallas import tpu as pltpu

# Reference LayerNorm(data_format='channels_first') is ConvNeXt-style, eps=1e-6.
EPS = 1e-6


# ----------------------------- in-kernel helpers -----------------------------

def _bf16(x):
    return x if x.dtype == jnp.bfloat16 else x.astype(jnp.bfloat16)


def _conv(w, x, b=None):
    """1x1 conv, channels-on-sublanes: (Cout,Cin)@(Cin,HW); bf16 MXU, f32 acc."""
    y = jnp.dot(_bf16(w), _bf16(x), preferred_element_type=jnp.float32)
    return y if b is None else y + b


def _spatial(h, m_t):
    """AdaptiveAvgPool / bilinear upsample as a bf16 (HW_in, HW_out) matmul."""
    return jnp.dot(_bf16(h), m_t, preferred_element_type=jnp.float32)


def _ln_cf(x, g, b):
    """LayerNorm(channels_first): normalize over the channel (sublane) axis."""
    mu = jnp.mean(x, axis=0, keepdims=True)
    var = jnp.mean((x - mu) * (x - mu), axis=0, keepdims=True)
    return (x - mu) * jax.lax.rsqrt(var + EPS) * g + b


def _enc_compute(x, w_ref, v_ref, pool_t):
    """to_subspace body: conv1x1 -> LN -> ReLU -> [pool] -> conv1x1 -> outer LN.

    Pool is applied BEFORE the second conv (exact: both linear, pool rows sum
    to 1 so the bias commutes), shrinking conv2 from HW to HW_sub columns.
    """
    c_in = x.shape[0]
    s = w_ref.shape[0]
    v = v_ref[...]                                           # (S, 6) f32
    h = _conv(w_ref[:, :c_in], x, v[:, 0:1])                 # (S, HW)
    h = jnp.maximum(_ln_cf(h, v[:, 1:2], v[:, 2:3]), 0.0)
    if pool_t is not None:
        h = _spatial(h, pool_t)                              # (S, HW_sub)
    h = _conv(w_ref[:, c_in:c_in + s], h, v[:, 3:4])
    return _ln_cf(h, v[:, 4:5], v[:, 5:6])                   # outer norm


def _dec_compute(z, w_ref, v_ref, b2, up_t):
    """predict_layer body: conv1x1 -> LN -> ReLU -> conv1x1 -> bilinear up."""
    s = z.shape[0]
    v = v_ref[...]                                           # (S, 3) f32
    h = _conv(w_ref[:s, :], z, v[:, 0:1])
    h = jnp.maximum(_ln_cf(h, v[:, 1:2], v[:, 2:3]), 0.0)
    h = _conv(w_ref[s:, :], h, b2)
    if up_t is not None:
        h = _spatial(h, up_t)
    return h


# ------------------------------ Pallas kernels --------------------------------

def _make_forward_kernel(cond_flags, pool_flags, alpha):
    """Fused stem + all layers + conditioning blend + spatial mean (per batch)."""
    n_layers = len(pool_flags)

    def kernel(*refs):
        it = iter(refs)
        x = next(it)[...]                                    # (Cin, HW) f32
        conds = [next(it)[...] if f else None for f in cond_flags]
        stem_w_ref = next(it)                                # (C0, Cin) bf16
        bias_ref = next(it)                                  # (Cmax, 1+L) f32
        w_refs = [next(it) for _ in range(n_layers)]
        pool_refs = [next(it) if f else None for f in pool_flags]
        res_refs = [next(it) for _ in range(n_layers)]
        pooled_ref = next(it)

        c0 = stem_w_ref.shape[0]
        h = jnp.maximum(_conv(stem_w_ref[...], x, bias_ref[:c0, 0:1]), 0.0)
        for i in range(n_layers):
            w = w_refs[i][...]
            c = w.shape[0]
            h = jnp.maximum(_conv(w, h, bias_ref[:c, i + 1:i + 2]), 0.0)
            if pool_refs[i] is not None:                     # AdaptiveAvgPool2d
                h = _spatial(h, pool_refs[i][...])
            if conds[i] is not None:                         # conditioning blend
                h = alpha * h + (1.0 - alpha) * conds[i]
            res_refs[i][...] = h
        # x.mean(-1).mean(-1) in NCHW == mean over the HW lane axis here.
        pooled_ref[...] = jnp.mean(h, axis=-1, keepdims=True)

    return kernel


def _make_encoder_kernel(has_pool):
    def kernel(*refs):
        it = iter(refs)
        x_ref = next(it)
        w_ref = next(it)
        v_ref = next(it)
        pool_t = next(it)[...] if has_pool else None
        out_ref = next(it)
        out_ref[...] = _enc_compute(x_ref[...], w_ref, v_ref, pool_t)
    return kernel


def _make_decoder_kernel(has_up):
    def kernel(*refs):
        it = iter(refs)
        z_ref = next(it)
        w_ref = next(it)
        v_ref = next(it)
        b2_ref = next(it)
        up_t = next(it)[...] if has_up else None
        out_ref = next(it)
        out_ref[...] = _dec_compute(z_ref[...], w_ref, v_ref, b2_ref[...], up_t)
    return kernel


def _make_enc_dec_kernel(has_pool, has_up):
    """Fused from_to_pred: encoder -> decoder, subspace intermediate in VMEM."""
    def kernel(*refs):
        it = iter(refs)
        x_ref = next(it)
        ew_ref = next(it)
        ev_ref = next(it)
        pool_t = next(it)[...] if has_pool else None
        dw_ref = next(it)
        dv_ref = next(it)
        db2_ref = next(it)
        up_t = next(it)[...] if has_up else None
        out_ref = next(it)
        z = _enc_compute(x_ref[...], ew_ref, ev_ref, pool_t)
        out_ref[...] = _dec_compute(z, dw_ref, dv_ref, db2_ref[...], up_t)
    return kernel


# ------------------------------ spec helpers ----------------------------------

def _batch_spec(c, hw):
    # Per-batch-element (C, HW) slab; batch dim squeezed out of the kernel.
    return pl.BlockSpec((None, c, hw), lambda b: (b, 0, 0))


def _rep_spec(shape):
    nd = len(shape)
    return pl.BlockSpec(shape, lambda b, _n=nd: (0,) * _n)


_COMPILER_PARAMS = pltpu.CompilerParams(
    dimension_semantics=("parallel",),
    vmem_limit_bytes=32 * 1024 * 1024,   # explicit budget (v5e default is 16MiB)
)


def _cost(flops, args, out_shapes):
    nbytes = 0
    for a in args:
        nbytes += int(np.prod(a.shape)) * a.dtype.itemsize
    for s in out_shapes:
        nbytes += int(np.prod(s.shape)) * np.dtype(s.dtype).itemsize
    return pl.CostEstimate(flops=int(flops), transcendentals=0,
                           bytes_accessed=int(nbytes))


# -------------------- host-side pool / upsample matrices ----------------------

def _avg_pool_matrix_1d(n_out, n_in):
    """nn.AdaptiveAvgPool2d along one axis as an (n_out, n_in) matrix."""
    m = np.zeros((n_out, n_in), np.float32)
    for o in range(n_out):
        s = (o * n_in) // n_out
        e = -(((-(o + 1)) * n_in) // n_out)        # ceil((o+1)*n_in/n_out)
        m[o, s:e] = 1.0 / (e - s)
    return m


def _bilinear_matrix_1d(n_out, n_in):
    """nn.Upsample(mode='bilinear', align_corners=True) along one axis."""
    m = np.zeros((n_out, n_in), np.float32)
    if n_out == 1 or n_in == 1:
        m[:, 0] = 1.0
        return m
    for o in range(n_out):
        c = o * (n_in - 1) / (n_out - 1)
        lo = int(np.floor(c))
        hi = min(lo + 1, n_in - 1)
        f = c - lo
        m[o, lo] += 1.0 - f
        m[o, hi] += f
    return m


def _pool_t_2d(n_out, n_in):
    p = _avg_pool_matrix_1d(n_out, n_in)
    return jnp.asarray(np.kron(p, p).T, dtype=jnp.bfloat16)   # (in^2, out^2)


def _bilinear_t_2d(n_out, n_in):
    p = _bilinear_matrix_1d(n_out, n_in)
    return jnp.asarray(np.kron(p, p).T, dtype=jnp.bfloat16)   # (in^2, out^2)


# --------------------------------- the module ---------------------------------

class ToySubspaceNet:
    """Concrete SubspaceNet. NCHW external API; kernels run on (C, H*W) slabs."""

    def __init__(self, subspace_size, in_channels, key):
        # TODO(synk): layer_sizes/stem_forward/layer_forward are abstract in
        # the reference module; this is one concrete synthetic instantiation.
        self.meta = OrderedDict([
            ("layer1", (16, 8)),    # (spatial_size, num_channels)
            ("layer2", (8, 16)),
        ])
        self.subspace_spatial = min(sp for sp, _ in self.meta.values())
        self.S = S = subspace_size

        keys = iter(jax.random.split(key, 64))

        def wmat(cout, cin, scale=0.1):
            return (scale * jax.random.normal(next(keys), (cout, cin),
                                              jnp.float32)).astype(jnp.bfloat16)

        def col(c, base=0.0, scale=0.01):
            return base + scale * jax.random.normal(next(keys), (c, 1),
                                                    jnp.float32)

        names = list(self.meta.keys())
        first_c = self.meta[names[0]][1]

        # stem + per-layer backbone convs (concrete stand-ins for abstract fns)
        self.stem_w = wmat(first_c, in_channels)
        stem_b = col(first_c)
        self.layers = OrderedDict()
        layer_biases = []
        prev_c = first_c
        for name, (_, c) in self.meta.items():
            self.layers[name] = {"w": wmat(c, prev_c)}
            layer_biases.append(col(c))
            prev_c = c

        # Consolidated bias slab (Cmax, 1 + n_layers): col 0 = stem, col i+1 =
        # layer i, zero-padded rows -> one operand instead of n_layers+1.
        cmax = max(first_c, *(c for _, c in self.meta.values()))
        slab = jnp.zeros((cmax, 1 + len(self.meta)), jnp.float32)
        slab = slab.at[:first_c, 0].set(stem_b[:, 0])
        for i, b in enumerate(layer_biases):
            slab = slab.at[:b.shape[0], i + 1].set(b[:, 0])
        self.bias_slab = slab

        # Outer norm (shared across layers), baked into each encoder's vec slab.
        ng = col(S, base=1.0)
        nb = col(S)

        # Encoders / decoders as in SubspaceNet.__init__, with pool / upsample
        # pre-baked as bf16 matrices and per-call params consolidated.
        self.enc, self.dec = OrderedDict(), OrderedDict()
        sp_sub = self.subspace_spatial
        for name, (sp, c) in self.meta.items():
            ew1, ew2 = wmat(S, c), wmat(S, S)
            self.enc[name] = {
                "w": jnp.concatenate([ew1, ew2], axis=1),          # (S, c+S) bf16
                # columns: b1, gamma, beta, b2, norm_gamma, norm_beta
                "v": jnp.concatenate([col(S), col(S, base=1.0), col(S),
                                      col(S), ng, nb], axis=1),    # (S, 6) f32
                "pool_t": None if sp == sp_sub else _pool_t_2d(sp_sub, sp),
            }
            dw1, dw2 = wmat(S, S), wmat(c, S)
            self.dec[name] = {
                "w": jnp.concatenate([dw1, dw2], axis=0),          # (S+c, S) bf16
                # columns: b1, gamma, beta
                "v": jnp.concatenate([col(S), col(S, base=1.0), col(S)],
                                     axis=1),                      # (S, 3) f32
                "b2": col(c),                                      # (c, 1) f32
                "up_t": None if sp == sp_sub else _bilinear_t_2d(sp, sp_sub),
            }
        self._fwd_pool_cache = {}

    # --------------------------- fused forward path ---------------------------

    def _fwd_pool_t(self, s_in, s_out):
        if s_in == s_out:
            return None
        key = (s_in, s_out)
        if key not in self._fwd_pool_cache:
            self._fwd_pool_cache[key] = _pool_t_2d(s_out, s_in)
        return self._fwd_pool_cache[key]

    def forward(self, x, conditioning=None, alpha=1.0):
        B, c_in, H, W = x.shape
        names = list(self.meta.keys())

        cond_flags, pool_mats, spatials, chans = [], [], [], []
        prev_sp = H
        for name in names:
            sp, c = self.meta[name]
            pool_mats.append(self._fwd_pool_t(prev_sp, sp))
            cond_flags.append(conditioning is not None and name in conditioning)
            spatials.append(sp)
            chans.append(c)
            prev_sp = sp
        pool_flags = [pm is not None for pm in pool_mats]

        # ---- operands (order mirrors kernel unpacking) ----
        args = [x.reshape(B, c_in, H * W)]
        in_specs = [_batch_spec(c_in, H * W)]
        for name, flag, sp, c in zip(names, cond_flags, spatials, chans):
            if flag:
                args.append(conditioning[name].reshape(B, c, sp * sp))
                in_specs.append(_batch_spec(c, sp * sp))
        args += [self.stem_w, self.bias_slab]
        in_specs += [_rep_spec(self.stem_w.shape), _rep_spec(self.bias_slab.shape)]
        for name in names:
            w = self.layers[name]["w"]
            args.append(w)
            in_specs.append(_rep_spec(w.shape))
        for pm in pool_mats:
            if pm is not None:
                args.append(pm)
                in_specs.append(_rep_spec(pm.shape))

        out_shapes, out_specs = [], []
        for sp, c in zip(spatials, chans):
            out_shapes.append(jax.ShapeDtypeStruct((B, c, sp * sp), jnp.float32))
            out_specs.append(_batch_spec(c, sp * sp))
        c_last = chans[-1]
        out_shapes.append(jax.ShapeDtypeStruct((B, c_last, 1), jnp.float32))
        out_specs.append(_batch_spec(c_last, 1))

        # Rough flop hint for XLA scheduling.
        c0 = self.stem_w.shape[0]
        flops = 2 * H * W * c_in * c0
        prev_c, prev_hw = c0, H * W
        for sp, c, has_p in zip(spatials, chans, pool_flags):
            flops += 2 * prev_hw * prev_c * c
            if has_p:
                flops += 2 * c * prev_hw * sp * sp
            prev_c, prev_hw = c, sp * sp
        flops *= B

        kernel = _make_forward_kernel(tuple(cond_flags), tuple(pool_flags),
                                      float(alpha))
        outs = pl.pallas_call(
            kernel,
            out_shape=tuple(out_shapes),
            grid=(B,),
            in_specs=in_specs,
            out_specs=tuple(out_specs),
            compiler_params=_COMPILER_PARAMS,
            cost_estimate=_cost(flops, args, out_shapes),
        )(*args)

        res_dict = OrderedDict()
        for name, sp, c, r in zip(names, spatials, chans, outs[:-1]):
            res_dict[name] = r.reshape(B, c, sp, sp)        # NCHW, like PyTorch
        pooled = outs[-1].reshape(B, c_last)
        return pooled, res_dict

    __call__ = forward

    # ------------------ encoder / decoder (single call each) ------------------

    def to_subspace(self, x, layer):
        B, c, hs, ws = x.shape
        p = self.enc[layer]
        S, sq = self.S, self.subspace_spatial ** 2
        hw = hs * ws
        has_pool = p["pool_t"] is not None

        args = [x.reshape(B, c, hw), p["w"], p["v"]]
        in_specs = [_batch_spec(c, hw), _rep_spec(p["w"].shape),
                    _rep_spec(p["v"].shape)]
        if has_pool:
            args.append(p["pool_t"])
            in_specs.append(_rep_spec(p["pool_t"].shape))

        out_shape = jax.ShapeDtypeStruct((B, S, sq), jnp.float32)
        flops = B * 2 * (hw * c * S + (S * hw * sq if has_pool else 0)
                         + (sq if has_pool else hw) * S * S)
        out = pl.pallas_call(
            _make_encoder_kernel(has_pool),
            out_shape=out_shape,
            grid=(B,),
            in_specs=in_specs,
            out_specs=_batch_spec(S, sq),
            compiler_params=_COMPILER_PARAMS,
            cost_estimate=_cost(flops, args, [out_shape]),
        )(*args)
        return out.reshape(B, S, self.subspace_spatial, self.subspace_spatial)

    def predict_layer(self, subspace_feat, layer):
        B, S, hs, ws = subspace_feat.shape
        p = self.dec[layer]
        sp, c = self.meta[layer]
        hw = hs * ws
        has_up = p["up_t"] is not None

        args = [subspace_feat.reshape(B, S, hw), p["w"], p["v"], p["b2"]]
        in_specs = [_batch_spec(S, hw), _rep_spec(p["w"].shape),
                    _rep_spec(p["v"].shape), _rep_spec(p["b2"].shape)]
        if has_up:
            args.append(p["up_t"])
            in_specs.append(_rep_spec(p["up_t"].shape))

        out_shape = jax.ShapeDtypeStruct((B, c, sp * sp), jnp.float32)
        flops = B * 2 * (hw * S * S + hw * S * c
                         + (c * hw * sp * sp if has_up else 0))
        out = pl.pallas_call(
            _make_decoder_kernel(has_up),
            out_shape=out_shape,
            grid=(B,),
            in_specs=in_specs,
            out_specs=_batch_spec(c, sp * sp),
            compiler_params=_COMPILER_PARAMS,
            cost_estimate=_cost(flops, args, [out_shape]),
        )(*args)
        return out.reshape(B, c, sp, sp)

    def from_to_pred(self, x, layer1, layer2):
        """Fused to_subspace(layer1) -> predict_layer(layer2): one pallas_call."""
        B, c1, hs, ws = x.shape
        e, d = self.enc[layer1], self.dec[layer2]
        S = self.S
        sp2, c2 = self.meta[layer2]
        sq = self.subspace_spatial ** 2
        hw = hs * ws
        has_pool = e["pool_t"] is not None
        has_up = d["up_t"] is not None

        args = [x.reshape(B, c1, hw), e["w"], e["v"]]
        in_specs = [_batch_spec(c1, hw), _rep_spec(e["w"].shape),
                    _rep_spec(e["v"].shape)]
        if has_pool:
            args.append(e["pool_t"])
            in_specs.append(_rep_spec(e["pool_t"].shape))
        args += [d["w"], d["v"], d["b2"]]
        in_specs += [_rep_spec(d["w"].shape), _rep_spec(d["v"].shape),
                     _rep_spec(d["b2"].shape)]
        if has_up:
            args.append(d["up_t"])
            in_specs.append(_rep_spec(d["up_t"].shape))

        out_shape = jax.ShapeDtypeStruct((B, c2, sp2 * sp2), jnp.float32)
        flops = B * 2 * (hw * c1 * S + (S * hw * sq if has_pool else 0)
                         + sq * S * S + sq * S * S + sq * S * c2
                         + (c2 * sq * sp2 * sp2 if has_up else 0))
        out = pl.pallas_call(
            _make_enc_dec_kernel(has_pool, has_up),
            out_shape=out_shape,
            grid=(B,),
            in_specs=in_specs,
            out_specs=_batch_spec(c2, sp2 * sp2),
            compiler_params=_COMPILER_PARAMS,
            cost_estimate=_cost(flops, args, [out_shape]),
        )(*args)
        return out.reshape(B, c2, sp2, sp2)

    # ---------------------------- conditioned paths ---------------------------

    def conditioned_forward_single(self, x, condition_dict, layer_conditions,
                                   alpha=1.0):
        conditionings = {}
        for from_layer, to_layer in layer_conditions:
            conditionings[to_layer] = self.from_to_pred(
                condition_dict[from_layer], from_layer, to_layer)
        return self(x, conditionings, alpha=alpha)

    def conditioned_forward(self, x, y, layer_conditions, alpha=1.0):
        _, res_dict = self(x)
        return self.conditioned_forward_single(x, res_dict, layer_conditions,
                                               alpha=alpha)


# ------------------------------------ main -------------------------------------

if __name__ == "__main__":
    key = jax.random.PRNGKey(0)
    k_in, k_par = jax.random.split(key)

    # PyTorch-style NCHW input: (batch=2, channels=4, 16, 16).
    x = jax.random.normal(k_in, (2, 4, 16, 16), jnp.float32)

    net = ToySubspaceNet(subspace_size=32, in_channels=4, key=k_par)

    # Plain forward: ONE fused pallas_call.
    pooled, res = net(x)
    # Conditioned forward: forward + fused enc/dec + conditioned forward (3 calls).
    cond_pooled, cond_res = net.conditioned_forward(
        x, x, layer_conditions=[("layer1", "layer2")], alpha=0.7)
    # Standalone encoder / decoder paths (one pallas_call each).
    z = net.to_subspace(res["layer1"], "layer1")
    y = net.predict_layer(z, "layer2")

    jax.block_until_ready((pooled, cond_pooled, z, y))
    assert pooled.shape == (2, 16) and cond_pooled.shape == (2, 16)
    assert res["layer1"].shape == (2, 8, 16, 16)
    assert res["layer2"].shape == (2, 16, 8, 8)
    assert cond_res["layer2"].shape == (2, 16, 8, 8)
    assert z.shape == (2, 32, 8, 8) and y.shape == (2, 16, 8, 8)
    print("KERNEL_OK")
</pallas_src>

<mosaic_0001>
module attributes {stable_mosaic.version = 11 : i64} {
  func.func @kernel(%arg0: i32, %arg1: memref<1x4x256xf32, #tpu.memory_space<vmem>>, %arg2: memref<8x4xbf16, #tpu.memory_space<vmem>>, %arg3: memref<16x3xf32, #tpu.memory_space<vmem>>, %arg4: memref<8x8xbf16, #tpu.memory_space<vmem>>, %arg5: memref<16x8xbf16, #tpu.memory_space<vmem>>, %arg6: memref<256x64xbf16, #tpu.memory_space<vmem>>, %arg7: memref<1x8x256xf32, #tpu.memory_space<vmem>>, %arg8: memref<1x16x64xf32, #tpu.memory_space<vmem>>, %arg9: memref<1x16x1xf32, #tpu.memory_space<vmem>>) attributes {dimension_semantics = [#tpu.dimension_semantics<parallel>], iteration_bounds = array<i64: 2>, scalar_prefetch = 0 : i64, scratch_operands = 0 : i64, tpu.core_type = #tpu.core_type<tc>, window_params = [{transform_indices = @transform_0, window_bounds = array<i64: 1, 4, 256>}, {pipeline_mode = #tpu.pipeline_mode<synchronous>, transform_indices = @transform_1, window_bounds = array<i64: 8, 4>}, {pipeline_mode = #tpu.pipeline_mode<synchronous>, transform_indices = @transform_2, window_bounds = array<i64: 16, 3>}, {pipeline_mode = #tpu.pipeline_mode<synchronous>, transform_indices = @transform_3, window_bounds = array<i64: 8, 8>}, {pipeline_mode = #tpu.pipeline_mode<synchronous>, transform_indices = @transform_4, window_bounds = array<i64: 16, 8>}, {pipeline_mode = #tpu.pipeline_mode<synchronous>, transform_indices = @transform_5, window_bounds = array<i64: 256, 64>}, {transform_indices = @transform_6, window_bounds = array<i64: 1, 8, 256>}, {transform_indices = @transform_7, window_bounds = array<i64: 1, 16, 64>}, {transform_indices = @transform_8, window_bounds = array<i64: 1, 16, 1>}]} {
    %c0 = arith.constant 0 : index
    %c0_0 = arith.constant 0 : index
    %c0_1 = arith.constant 0 : index
    %0 = vector.load %arg1[%c0, %c0_0, %c0_1] : memref<1x4x256xf32, #tpu.memory_space<vmem>>, vector<1x4x256xf32>
    %1 = vector.shape_cast %0 : vector<1x4x256xf32> to vector<4x256xf32>
    %c0_2 = arith.constant 0 : index
    %c0_3 = arith.constant 0 : index
    %2 = vector.load %arg2[%c0_2, %c0_3] : memref<8x4xbf16, #tpu.memory_space<vmem>>, vector<8x4xbf16>
    %c0_4 = arith.constant 0 : index
    %c0_5 = arith.constant 0 : index
    %3 = vector.load %arg3[%c0_4, %c0_5] : memref<16x3xf32, #tpu.memory_space<vmem>>, vector<8x1xf32>
    %4 = arith.truncf %1 : vector<4x256xf32> to vector<4x256xbf16>
    %cst = arith.constant dense<0.000000e+00> : vector<8x256xf32>
    %5 = tpu.matmul %2, %4, %cst {dimension_numbers = #tpu.dot_dimension_numbers<[1], [0], [0], [1], [0, 0, 1, 1], [], []>} : vector<8x4xbf16>, vector<4x256xbf16>, vector<8x256xf32> -> vector<8x256xf32>
    %6 = vector.broadcast %3 : vector<8x1xf32> to vector<8x256xf32>
    %7 = arith.addf %5, %6 : vector<8x256xf32>
    %cst_6 = arith.constant 0.000000e+00 : f32
    %8 = vector.broadcast %cst_6 : f32 to vector<8x256xf32>
    %9 = arith.maximumf %7, %8 : vector<8x256xf32>
    %c0_7 = arith.constant 0 : index
    %c0_8 = arith.constant 0 : index
    %10 = vector.load %arg4[%c0_7, %c0_8] : memref<8x8xbf16, #tpu.memory_space<vmem>>, vector<8x8xbf16>
    %c0_9 = arith.constant 0 : index
    %c1 = arith.constant 1 : index
    %11 = vector.load %arg3[%c0_9, %c1] : memref<16x3xf32, #tpu.memory_space<vmem>>, vector<8x1xf32>
    %12 = arith.truncf %9 : vector<8x256xf32> to vector<8x256xbf16>
    %cst_10 = arith.constant dense<0.000000e+00> : vector<8x256xf32>
    %13 = tpu.matmul %10, %12, %cst_10 {dimension_numbers = #tpu.dot_dimension_numbers<[1], [0], [0], [1], [0, 0, 1, 1], [], []>} : vector<8x8xbf16>, vector<8x256xbf16>, vector<8x256xf32> -> vector<8x256xf32>
    %14 = vector.broadcast %11 : vector<8x1xf32> to vector<8x256xf32>
    %15 = arith.addf %13, %14 : vector<8x256xf32>
    %cst_11 = arith.constant 0.000000e+00 : f32
    %16 = vector.broadcast %cst_11 : f32 to vector<8x256xf32>
    %17 = arith.maximumf %15, %16 : vector<8x256xf32>
    %c0_12 = arith.constant 0 : index
    %c0_13 = arith.constant 0 : index
    %c0_14 = arith.constant 0 : index
    %18 = vector.load %arg7[%c0_12, %c0_13, %c0_14] : memref<1x8x256xf32, #tpu.memory_space<vmem>>, vector<1x8x256xf32>
    %19 = vector.shape_cast %18 : vector<1x8x256xf32> to vector<8x256xf32>
    %20 = vector.shape_cast %17 : vector<8x256xf32> to vector<1x8x256xf32>
    tpu.vector_store %arg7[%c0_12, %c0_13, %c0_14], %20 {strides = array<i32>} : memref<1x8x256xf32, #tpu.memory_space<vmem>>, vector<1x8x256xf32>,
    %c0_15 = arith.constant 0 : index
    %c0_16 = arith.constant 0 : index
    %21 = vector.load %arg5[%c0_15, %c0_16] : memref<16x8xbf16, #tpu.memory_space<vmem>>, vector<16x8xbf16>
    %c0_17 = arith.constant 0 : index
    %c2 = arith.constant 2 : index
    %22 = vector.load %arg3[%c0_17, %c2] : memref<16x3xf32, #tpu.memory_space<vmem>>, vector<16x1xf32>
    %23 = arith.truncf %17 : vector<8x256xf32> to vector<8x256xbf16>
    %cst_18 = arith.constant dense<0.000000e+00> : vector<16x256xf32>
    %24 = tpu.matmul %21, %23, %cst_18 {dimension_numbers = #tpu.dot_dimension_numbers<[1], [0], [0], [1], [0, 0, 1, 1], [], []>} : vector<16x8xbf16>, vector<8x256xbf16>, vector<16x256xf32> -> vector<16x256xf32>
    %25 = vector.broadcast %22 : vector<16x1xf32> to vector<16x256xf32>
    %26 = arith.addf %24, %25 : vector<16x256xf32>
    %cst_19 = arith.constant 0.000000e+00 : f32
    %27 = vector.broadcast %cst_19 : f32 to vector<16x256xf32>
    %28 = arith.maximumf %26, %27 : vector<16x256xf32>
    %c0_20 = arith.constant 0 : index
    %c0_21 = arith.constant 0 : index
    %29 = vector.load %arg6[%c0_20, %c0_21] : memref<256x64xbf16, #tpu.memory_space<vmem>>, vector<256x64xbf16>
    %30 = arith.truncf %28 : vector<16x256xf32> to vector<16x256xbf16>
    %cst_22 = arith.constant dense<0.000000e+00> : vector<16x64xf32>
    %31 = tpu.matmul %30, %29, %cst_22 {dimension_numbers = #tpu.dot_dimension_numbers<[1], [0], [0], [1], [0, 0, 1, 1], [], []>} : vector<16x256xbf16>, vector<256x64xbf16>, vector<16x64xf32> -> vector<16x64xf32>
    %c0_23 = arith.constant 0 : index
    %c0_24 = arith.constant 0 : index
    %c0_25 = arith.constant 0 : index
    %32 = vector.load %arg8[%c0_23, %c0_24, %c0_25] : memref<1x16x64xf32, #tpu.memory_space<vmem>>, vector<1x16x64xf32>
    %33 = vector.shape_cast %32 : vector<1x16x64xf32> to vector<16x64xf32>
    %34 = vector.shape_cast %31 : vector<16x64xf32> to vector<1x16x64xf32>
    tpu.vector_store %arg8[%c0_23, %c0_24, %c0_25], %34 {strides = array<i32>} : memref<1x16x64xf32, #tpu.memory_space<vmem>>, vector<1x16x64xf32>,
    %cst_26 = arith.constant dense<0.000000e+00> : vector<16xf32>
    %35 = vector.multi_reduction <add>, %31, %cst_26 [1] : vector<16x64xf32> to vector<16xf32>
    %36 = vector.shape_cast %35 : vector<16xf32> to vector<16x1xf32>
    %cst_27 = arith.constant 6.400000e+01 : f32
    %37 = vector.broadcast %cst_27 : f32 to vector<16x1xf32>
    %38 = arith.divf %36, %37 : vector<16x1xf32>
    %c0_28 = arith.constant 0 : index
    %c0_29 = arith.constant 0 : index
    %c0_30 = arith.constant 0 : index
    %39 = vector.load %arg9[%c0_28, %c0_29, %c0_30] : memref<1x16x1xf32, #tpu.memory_space<vmem>>, vector<1x16x1xf32>
    %40 = vector.shape_cast %39 : vector<1x16x1xf32> to vector<16x1xf32>
    %41 = vector.shape_cast %38 : vector<16x1xf32> to vector<1x16x1xf32>
    tpu.vector_store %arg9[%c0_28, %c0_29, %c0_30], %41 {strides = array<i32>} : memref<1x16x1xf32, #tpu.memory_space<vmem>>, vector<1x16x1xf32>,
    return
  }
  func.func @transform_0(%arg0: i32) -> (i32, i32, i32) {
    %c0_i32 = arith.constant 0 : i32
    %c0_i32_0 = arith.constant 0 : i32
    %c0_i32_1 = arith.constant 0 : i32
    return %arg0, %c0_i32, %c0_i32_0 : i32, i32, i32
  }
  func.func @transform_1(%arg0: i32) -> (i32, i32) {
    %c0_i32 = arith.constant 0 : i32
    %c0_i32_0 = arith.constant 0 : i32
    %c0_i32_1 = arith.constant 0 : i32
    return %c0_i32, %c0_i32_0 : i32, i32
  }
  func.func @transform_2(%arg0: i32) -> (i32, i32) {
    %c0_i32 = arith.constant 0 : i32
    %c0_i32_0 = arith.constant 0 : i32
    %c0_i32_1 = arith.constant 0 : i32
    return %c0_i32, %c0_i32_0 : i32, i32
  }
  func.func @transform_3(%arg0: i32) -> (i32, i32) {
    %c0_i32 = arith.constant 0 : i32
    %c0_i32_0 = arith.constant 0 : i32
    %c0_i32_1 = arith.constant 0 : i32
    return %c0_i32, %c0_i32_0 : i32, i32
  }
  func.func @transform_4(%arg0: i32) -> (i32, i32) {
    %c0_i32 = arith.constant 0 : i32
    %c0_i32_0 = arith.constant 0 : i32
    %c0_i32_1 = arith.constant 0 : i32
    return %c0_i32, %c0_i32_0 : i32, i32
  }
  func.func @transform_5(%arg0: i32) -> (i32, i32) {
    %c0_i32 = arith.constant 0 : i32
    %c0_i32_0 = arith.constant 0 : i32
    %c0_i32_1 = arith.constant 0 : i32
    return %c0_i32, %c0_i32_0 : i32, i32
  }
  func.func @transform_6(%arg0: i32) -> (i32, i32, i32) {
    %c0_i32 = arith.constant 0 : i32
    %c0_i32_0 = arith.constant 0 : i32
    %c0_i32_1 = arith.constant 0 : i32
    return %arg0, %c0_i32, %c0_i32_0 : i32, i32, i32
  }
  func.func @transform_7(%arg0: i32) -> (i32, i32, i32) {
    %c0_i32 = arith.constant 0 : i32
    %c0_i32_0 = arith.constant 0 : i32
    %c0_i32_1 = arith.constant 0 : i32
    return %arg0, %c0_i32, %c0_i32_0 : i32, i32, i32
  }
  func.func @transform_8(%arg0: i32) -> (i32, i32, i32) {
    %c0_i32 = arith.constant 0 : i32
    %c0_i32_0 = arith.constant 0 : i32
    %c0_i32_1 = arith.constant 0 : i32
    return %arg0, %c0_i32, %c0_i32_0 : i32, i32, i32
  }
}

</mosaic_0001>

<llo_original>
// kernel: tpu_custom_call.1
$region0: #{tpu_custom_call.1}
  #allocation0 [shape = 'u32[]', space=smem, size = 0x4, offset = 0x4, fixed_abs, tag = 'smem constant byte address 0x4 - core index']
  #allocation1 [shape = 'u32[144,128]{1,0:T(1,128)}', space=vmem, size = 0x12000, scoped, tag = 'internal scratch']
  %s0 = inlined_call_operand.vmem [shape: f32[2,4,256], index: 0, kind: input, shape index: {}]
  %s1 = inlined_call_operand.vmem [shape: bf16[8,4], index: 1, kind: input, shape index: {}]
  %s2 = inlined_call_operand.vmem [shape: f32[16,3], index: 2, kind: input, shape index: {}]
  %s3 = inlined_call_operand.vmem [shape: bf16[8,8], index: 3, kind: input, shape index: {}]
  %s4 = inlined_call_operand.vmem [shape: bf16[16,8], index: 4, kind: input, shape index: {}]
  %s5 = inlined_call_operand.vmem [shape: bf16[256,64], index: 5, kind: input, shape index: {}]
  %s6 = inlined_call_operand.hbm [shape: f32[2,8,256], index: 6, kind: output, shape index: {0}]
  %s7 = inlined_call_operand.hbm [shape: f32[2,16,64], index: 7, kind: output, shape index: {1}]
  %s8 = inlined_call_operand.vmem [shape: f32[2,16,1], index: 8, kind: output, shape index: {2}]
  %9 = xla_tuple %s6, %s7, %s8
  %s10 = sld [smem:[#allocation0]]
  $region73: #{tpu_custom_call.1} parent=0
    _
  %s12 = ssub.s32 1, %s10
  %s13 = scalar_select 0, %s12, %s10
  $region1: #{tpu_custom_call.1} parent=0
    #allocation2 [shape = 'u8[16384]{0}', space=vmem, size = 0x4000, scoped, tag = 'output window, operand 0']
    #allocation3 [shape = 's32[2]{0}', space=sflag, size = 0x8, scoped, tag = 'scoped memory for tpu_custom_call.1']
    #allocation4 [shape = 'u8[16384]{0}', space=vmem, size = 0x4000, scoped, tag = 'output window, operand 1']
    #allocation5 [shape = 's32[2]{0}', space=sflag, size = 0x8, scoped, tag = 'scoped memory for tpu_custom_call.1']
    %14 = vsyncpa [#allocation3], 0
    %s15 = scalar_lea.sflag [#allocation3], 1
    %16 = vsyncpa %s15, 0
    %17 = vsyncpa [#allocation5], 0
    %s18 = scalar_lea.sflag [#allocation5], 1
    %19 = vsyncpa %s18, 0
    loop: start=0, step=1, limit=4
    $region2: #{tpu_custom_call.1} parent=1 // loop_pre_header
      _
    $region3: #{tpu_custom_call.1} parent=1 // loop_header
      %s21 = sphi 0, %s25
      %p22 = scmp.ge.s32.totalorder %s21, 4
      %s31 = sphi 0, %s33
      %s34 = sphi 0, %s31
      %s35 = sphi 0, %s34
      %s51 = sphi 0, %s35
      %s55 = sphi 0, %s55
      %s57 = sphi 0, %s55
      %s58 = sphi 0, %s57
      %s72 = sphi 0, %s58
      %s76 = sphi 0, %s76
      %s78 = sphi 0, %s76
      %s79 = sphi 0, %s78
      %s93 = sphi 0, %s79
      %s97 = sphi 0, %s97
      %s99 = sphi 0, %s97
      %s100 = sphi 0, %s99
      %s114 = sphi 0, %s100
      %s118 = sphi 0, %s118
      %s120 = sphi 0, %s118
      %s121 = sphi 0, %s120
      %s135 = sphi 0, %s121
      %s139 = sphi 0, %s139
      %s141 = sphi 0, %s139
      %s142 = sphi 0, %s141
      %s156 = sphi 0, %s142
      %s162 = sphi 0, %s164
      %s165 = sphi 0, %s162
      %s166 = sphi 0, %s165
      %s182 = sphi 0, %s166
      %s188 = sphi 0, %s190
      %s191 = sphi 0, %s188
      %s192 = sphi 0, %s191
      %s208 = sphi 0, %s192
      %s214 = sphi 0, %s216
      %s217 = sphi 0, %s214
      %s218 = sphi 0, %s217
      %s234 = sphi 0, %s218
    $region4: #{tpu_custom_call.1} parent=1 // loop_header_branch
      %24 = sbr.rel (%p22) target = $region8
    $region5: #{tpu_custom_call.1} parent=1 // loop_body
      %s26 = ssub.s32 %s21, 1
      %s27 = ssub.s32 %s21, 2
      %s28 = sadd.s32 %s21, 1
      %s29 = ssub.s32 %s21, %s28
      %p30 = scmp.eq.s32.totalorder %s29, 0
      %s32 = sadd.s32 %s31, 1
      %s33 = scalar_select %p30, %s31, %s32
      %p36 = pneg %p30
      %p37 = scmp.eq.s32.totalorder %s21, 1
      %p38 = por %p36, %p37
      %p39 = scmp.ne.s32.totalorder %s31, %s34
      %p40 = scmp.eq.s32.totalorder %s21, 0
      %p41 = por %p39, %p40
      %p42 = scmp.ne.s32.totalorder %s31, %s34
      %p43 = scmp.eq.s32.totalorder %s26, 1
      %p44 = por %p42, %p43
      %p45 = scmp.ne.s32.totalorder %s34, %s35
      %p46 = scmp.eq.s32.totalorder %s26, 0
      %p47 = por %p45, %p46
      %p48 = scmp.ne.s32.totalorder %s34, %s35
      %p49 = scmp.eq.s32.totalorder %s27, 1
      %p50 = por %p48, %p49
      %p52 = scmp.ne.s32.totalorder %s35, %s51
      %p53 = scmp.eq.s32.totalorder %s27, 0
      %p54 = por %p52, %p53
      %s56 = sadd.s32 %s55, 1
      %p59 = scmp.eq.s32.totalorder %s21, 1
      %p60 = scmp.ne.s32.totalorder %s55, %s57
      %p61 = scmp.eq.s32.totalorder %s21, 0
      %p62 = por %p60, %p61
      %p63 = scmp.ne.s32.totalorder %s55, %s57
      %p64 = scmp.eq.s32.totalorder %s26, 1
      %p65 = por %p63, %p64
      %p66 = scmp.ne.s32.totalorder %s57, %s58
      %p67 = scmp.eq.s32.totalorder %s26, 0
      %p68 = por %p66, %p67
      %p69 = scmp.ne.s32.totalorder %s57, %s58
      %p70 = scmp.eq.s32.totalorder %s27, 1
      %p71 = por %p69, %p70
      %p73 = scmp.ne.s32.totalorder %s58, %s72
      %p74 = scmp.eq.s32.totalorder %s27, 0
      %p75 = por %p73, %p74
      %s77 = sadd.s32 %s76, 1
      %p80 = scmp.eq.s32.totalorder %s21, 1
      %p81 = scmp.ne.s32.totalorder %s76, %s78
      %p82 = scmp.eq.s32.totalorder %s21, 0
      %p83 = por %p81, %p82
      %p84 = scmp.ne.s32.totalorder %s76, %s78
      %p85 = scmp.eq.s32.totalorder %s26, 1
      %p86 = por %p84, %p85
      %p87 = scmp.ne.s32.totalorder %s78, %s79
      %p88 = scmp.eq.s32.totalorder %s26, 0
      %p89 = por %p87, %p88
      %p90 = scmp.ne.s32.totalorder %s78, %s79
      %p91 = scmp.eq.s32.totalorder %s27, 1
      %p92 = por %p90, %p91
      %p94 = scmp.ne.s32.totalorder %s79, %s93
      %p95 = scmp.eq.s32.totalorder %s27, 0
      %p96 = por %p94, %p95
      %s98 = sadd.s32 %s97, 1
      %p101 = scmp.eq.s32.totalorder %s21, 1
      %p102 = scmp.ne.s32.totalorder %s97, %s99
      %p103 = scmp.eq.s32.totalorder %s21, 0
      %p104 = por %p102, %p103
      %p105 = scmp.ne.s32.totalorder %s97, %s99
      %p106 = scmp.eq.s32.totalorder %s26, 1
      %p107 = por %p105, %p106
      %p108 = scmp.ne.s32.totalorder %s99, %s100
      %p109 = scmp.eq.s32.totalorder %s26, 0
      %p110 = por %p108, %p109
      %p111 = scmp.ne.s32.totalorder %s99, %s100
      %p112 = scmp.eq.s32.totalorder %s27, 1
      %p113 = por %p111, %p112
      %p115 = scmp.ne.s32.totalorder %s100, %s114
      %p116 = scmp.eq.s32.totalorder %s27, 0
      %p117 = por %p115, %p116
      %s119 = sadd.s32 %s118, 1
      %p122 = scmp.eq.s32.totalorder %s21, 1
      %p123 = scmp.ne.s32.totalorder %s118, %s120
      %p124 = scmp.eq.s32.totalorder %s21, 0
      %p125 = por %p123, %p124
      %p126 = scmp.ne.s32.totalorder %s118, %s120
      %p127 = scmp.eq.s32.totalorder %s26, 1
      %p128 = por %p126, %p127
      %p129 = scmp.ne.s32.totalorder %s120, %s121
      %p130 = scmp.eq.s32.totalorder %s26, 0
      %p131 = por %p129, %p130
      %p132 = scmp.ne.s32.totalorder %s120, %s121
      %p133 = scmp.eq.s32.totalorder %s27, 1
      %p134 = por %p132, %p133
      %p136 = scmp.ne.s32.totalorder %s121, %s135
      %p137 = scmp.eq.s32.totalorder %s27, 0
      %p138 = por %p136, %p137
      %s140 = sadd.s32 %s139, 1
      %p143 = scmp.eq.s32.totalorder %s21, 1
      %p144 = scmp.ne.s32.totalorder %s139, %s141
      %p145 = scmp.eq.s32.totalorder %s21, 0
      %p146 = por %p144, %p145
      %p147 = scmp.ne.s32.totalorder %s139, %s141
      %p148 = scmp.eq.s32.totalorder %s26, 1
      %p149 = por %p147, %p148
      %p150 = scmp.ne.s32.totalorder %s141, %s142
      %p151 = scmp.eq.s32.totalorder %s26, 0
      %p152 = por %p150, %p151
      %p153 = scmp.ne.s32.totalorder %s141, %s142
      %p154 = scmp.eq.s32.totalorder %s27, 1
      %p155 = por %p153, %p154
      %p157 = scmp.ne.s32.totalorder %s142, %s156
      %p158 = scmp.eq.s32.totalorder %s27, 0
      %p159 = por %p157, %p158
      %s160 = ssub.s32 %s21, %s28
      %p161 = scmp.eq.s32.totalorder %s160, 0
      %s163 = sadd.s32 %s162, 1
      %s164 = scalar_select %p161, %s162, %s163
      %p167 = pneg %p161
      %p168 = scmp.eq.s32.totalorder %s21, 1
      %p169 = por %p167, %p168
      %p170 = scmp.ne.s32.totalorder %s162, %s165
      %p171 = scmp.eq.s32.totalorder %s21, 0
      %p172 = por %p170, %p171
      %p173 = scmp.ne.s32.totalorder %s162, %s165
      %p174 = scmp.eq.s32.totalorder %s26, 1
      %p175 = por %p173, %p174
      %p176 = scmp.ne.s32.totalorder %s165, %s166
      %p177 = scmp.eq.s32.totalorder %s26, 0
      %p178 = por %p176, %p177
      %p179 = scmp.ne.s32.totalorder %s165, %s166
      %p180 = scmp.eq.s32.totalorder %s27, 1
      %p181 = por %p179, %p180
      %p183 = scmp.ne.s32.totalorder %s166, %s182
      %p184 = scmp.eq.s32.totalorder %s27, 0
      %p185 = por %p183, %p184
      %s186 = ssub.s32 %s21, %s28
      %p187 = scmp.eq.s32.totalorder %s186, 0
      %s189 = sadd.s32 %s188, 1
      %s190 = scalar_select %p187, %s188, %s189
      %p193 = pneg %p187
      %p194 = scmp.eq.s32.totalorder %s21, 1
      %p195 = por %p193, %p194
      %p196 = scmp.ne.s32.totalorder %s188, %s191
      %p197 = scmp.eq.s32.totalorder %s21, 0
      %p198 = por %p196, %p197
      %p199 = scmp.ne.s32.totalorder %s188, %s191
      %p200 = scmp.eq.s32.totalorder %s26, 1
      %p201 = por %p199, %p200
      %p202 = scmp.ne.s32.totalorder %s191, %s192
      %p203 = scmp.eq.s32.totalorder %s26, 0
      %p204 = por %p202, %p203
      %p205 = scmp.ne.s32.totalorder %s191, %s192
      %p206 = scmp.eq.s32.totalorder %s27, 1
      %p207 = por %p205, %p206
      %p209 = scmp.ne.s32.totalorder %s192, %s208
      %p210 = scmp.eq.s32.totalorder %s27, 0
      %p211 = por %p209, %p210
      %s212 = ssub.s32 %s21, %s28
      %p213 = scmp.eq.s32.totalorder %s212, 0
      %s215 = sadd.s32 %s214, 1
      %s216 = scalar_select %p213, %s214, %s215
      %p219 = pneg %p213
      %p220 = scmp.eq.s32.totalorder %s21, 1
      %p221 = por %p219, %p220
      %p222 = scmp.ne.s32.totalorder %s214, %s217
      %p223 = scmp.eq.s32.totalorder %s21, 0
      %p224 = por %p222, %p223
      %p225 = scmp.ne.s32.totalorder %s214, %s217
      %p226 = scmp.eq.s32.totalorder %s26, 1
      %p227 = por %p225, %p226
      %p228 = scmp.ne.s32.totalorder %s217, %s218
      %p229 = scmp.eq.s32.totalorder %s26, 0
      %p230 = por %p228, %p229
      %p231 = scmp.ne.s32.totalorder %s217, %s218
      %p232 = scmp.eq.s32.totalorder %s27, 1
      %p233 = por %p231, %p232
      %p235 = scmp.ne.s32.totalorder %s218, %s234
      %p236 = scmp.eq.s32.totalorder %s27, 0
      %p237 = por %p235, %p236
      %p238 = scmp.le.s32.totalorder 1, %s21
      %p239 = scmp.lt.s32.totalorder %s21, 3
      %p240 = pnand %p238, %p239
      %p241 = pneg %p240
      // Predicated region
      $region9: #{tpu_custom_call.1} parent=5 // pred_check
        _
      $region10: #{tpu_custom_call.1} parent=5 // pred_check_branch
        %243 = sbr.rel (%p240) target = $region12
      $region11: #{tpu_custom_call.1} parent=5 // pred_region
        %s244 = ssub.s32 %s21, 1
        // Predicated region
        $region13: #{tpu_custom_call.1} parent=11 // pred_check
          %p245 = pneg %p68
        $region14: #{tpu_custom_call.1} parent=11 // pred_check_branch
          %247 = sbr.rel (%p245) target = $region16
        $region15: #{tpu_custom_call.1} parent=11 // pred_region
          _
        $region16: #{tpu_custom_call.1} parent=11 // pred_fallthru
          _
        // Predicated region
        $region17: #{tpu_custom_call.1} parent=11 // pred_check
          %p248 = pneg %p89
        $region18: #{tpu_custom_call.1} parent=11 // pred_check_branch
          %250 = sbr.rel (%p248) target = $region20
        $region19: #{tpu_custom_call.1} parent=11 // pred_region
          _
        $region20: #{tpu_custom_call.1} parent=11 // pred_fallthru
          _
        // Predicated region
        $region21: #{tpu_custom_call.1} parent=11 // pred_check
          %p251 = pneg %p110
        $region22: #{tpu_custom_call.1} parent=11 // pred_check_branch
          %253 = sbr.rel (%p251) target = $region24
        $region23: #{tpu_custom_call.1} parent=11 // pred_region
          _
        $region24: #{tpu_custom_call.1} parent=11 // pred_fallthru
          _
        // Predicated region
        $region25: #{tpu_custom_call.1} parent=11 // pred_check
          %p254 = pneg %p131
        $region26: #{tpu_custom_call.1} parent=11 // pred_check_branch
          %256 = sbr.rel (%p254) target = $region28
        $region27: #{tpu_custom_call.1} parent=11 // pred_region
          _
        $region28: #{tpu_custom_call.1} parent=11 // pred_fallthru
          _
        // Predicated region
        $region29: #{tpu_custom_call.1} parent=11 // pred_check
          %p257 = pneg %p152
        $region30: #{tpu_custom_call.1} parent=11 // pred_check_branch
          %259 = sbr.rel (%p257) target = $region32
        $region31: #{tpu_custom_call.1} parent=11 // pred_region
          _
        $region32: #{tpu_custom_call.1} parent=11 // pred_fallthru
          _
      $region12: #{tpu_custom_call.1} parent=5 // pred_fallthru
        _
      %p260 = scmp.lt.s32.totalorder %s21, 2
      // Predicated region
      $region33: #{tpu_custom_call.1} parent=5 // pred_check
        %p261 = pneg %p260
      $region34: #{tpu_custom_call.1} parent=5 // pred_check_branch
        %263 = sbr.rel (%p261) target = $region36
      $region35: #{tpu_custom_call.1} parent=5 // pred_region
        // Predicated region
        $region37: #{tpu_custom_call.1} parent=35 // pred_check
          %p264 = pneg %p41
        $region38: #{tpu_custom_call.1} parent=35 // pred_check_branch
          %266 = sbr.rel (%p264) target = $region40
        $region39: #{tpu_custom_call.1} parent=35 // pred_region
          %p267 = scmp.lt.s32.totalorder %s21, 1
          %s268 = scalar_select %p267, %s21, 1
          %s269 = smul.addr %s268, 2
          %s270 = smul.addr %s269, 4
          %s271 = scalar_lea.vmem %s0, %s270
        $region40: #{tpu_custom_call.1} parent=35 // pred_fallthru
          _
      $region36: #{tpu_custom_call.1} parent=5 // pred_fallthru
        _
      %p272 = scmp.le.s32.totalorder 1, %s21
      %p273 = scmp.lt.s32.totalorder %s21, 3
      %p274 = pnand %p272, %p273
      %p275 = pneg %p274
      // Predicated region
      $region41: #{tpu_custom_call.1} parent=5 // pred_check
        _
      $region42: #{tpu_custom_call.1} parent=5 // pred_check_branch
        %277 = sbr.rel (%p274) target = $region44
      $region43: #{tpu_custom_call.1} parent=5 // pred_region
        %s278 = ssub.s32 %s21, 1
        %p279 = scmp.lt.s32.totalorder %s26, 1
        %s280 = scalar_select %p279, %s26, 1
        %s281 = smul.addr %s280, 2
        %s282 = smul.addr %s281, 4
        %s283 = scalar_lea.vmem %s0, %s282
        %p284 = pneg %p47
        %p285 = pneg %p44
        %p286 = pneg %p68
        %p287 = pneg %p65
        %p288 = pneg %p89
        %p289 = pneg %p86
        %p290 = pneg %p110
        %p291 = pneg %p107
        %p292 = pneg %p131
        %p293 = pneg %p128
        %p294 = pneg %p152
        %p295 = pneg %p149
        %p296 = pneg %p178
        %p297 = pneg %p175
        %s298 = sand.u32 %s165, 1
        %s299 = scalar_lea.sflag [#allocation3], %s298
        %s300 = sand.u32 %s165, 1
        %s301 = smul.addr %s300, 16
        %s302 = scalar_lea.vmem [#allocation2], %s301
        %p303 = pneg %p204
        %p304 = pneg %p201
        %s305 = sand.u32 %s191, 1
        %s306 = scalar_lea.sflag [#allocation5], %s305
        %s307 = sand.u32 %s191, 1
        %s308 = smul.addr %s307, 16
        %s309 = scalar_lea.vmem [#allocation4], %s308
        %p310 = pneg %p230
        %p311 = pneg %p227
        %p312 = scmp.lt.s32.totalorder %s26, 1
        %s313 = scalar_select %p312, %s26, 1
        %s314 = smul.addr %s313, 2
        %s315 = smul.addr %s314, 8
        %s316 = scalar_lea.vmem %s8, %s315
        %p317 = scmp.lt.s32.totalorder %s26, 1
        %s318 = scalar_select %p317, %s26, 1
        %s319 = smul.addr %s318, 2
        %s320 = smul.addr %s319, 4
        %s321 = scalar_lea.vmem %s0, %s320
        %p322 = scmp.lt.s32.totalorder %s26, 1
        %s323 = scalar_select %p322, %s26, 1
        %s324 = smul.addr %s323, 2
        %s325 = smul.addr %s324, 8
        %s326 = scalar_lea.vmem %s8, %s325
        %v328 = vld [vmem:[%s321] sm:$0xff]
        %v329 = vld [vmem:[%s1] sm:$0xf]
        %v330 = vld [vmem:[%s2] sm:$0xff]
        %v332 = vcombine.high %v328, %v328
        %v334 = vpack.c.bf16 %v328, %v328
        %v335 = vpack.c.bf16 %v332, %v332
        %337 = vset.pattern.permute.xlu0 0
        %338 = vperm.xlu0 %337, %v330
        %v339 = vpop.permute.xlu0 %338
        %vm341 = vcmask 31744
        %v343 = vsel %vm341, %v329, 0
        %vm345 = vcmask 1041408
        %v347 = vsel %vm345, %v334, 0
        %v350 = vsel %vm345, %v335, 0
        %352 = vmatprep.subr.bf16.mxu0 0
        %353 = vmatpush1.bf16.msra.mxu0 0
        %354 = vmatprep.subr.bf16.mxu0 0
        %355 = vmatpush1.bf16.msra.mxu0 0
        %356 = vmatprep.subr.bf16.mxu0 0
        %357 = vmatpush1.bf16.msra.mxu0 0
        %358 = vmatprep.subr.bf16.mxu0 0
        %359 = vmatpush1.bf16.msra.mxu0 0
        %360 = vmatprep.subr.bf16.mxu0 0
        %361 = vmatpush1.bf16.msra.mxu0 0
        %362 = vmatprep.subr.bf16.mxu0 0
        %363 = vmatpush1.bf16.msra.mxu0 0
        %364 = vmatprep.subr.bf16.mxu0 0
        %365 = vmatpush1.bf16.msra.mxu0 0
        %366 = vmatprep.subr.bf16.mxu0 %v350
        %367 = vmatpush1.bf16.msra.mxu0 %v347
        %368 = vmatprep.subr.bf16.mxu0 0
        %369 = vmatpush2.bf16.msra.mxu0 0
        %370 = vmatprep.subr.bf16.mxu0 0
        %371 = vmatpush2.bf16.msra.mxu0 0
        %372 = vmatprep.subr.bf16.mxu0 0
        %373 = vmatpush2.bf16.msra.mxu0 0
        %374 = vmatprep.subr.bf16.mxu0 0
        %375 = vmatpush2.bf16.msra.mxu0 0
        %376 = vmatprep.subr.bf16.mxu0 0
        %377 = vmatpush2.bf16.msra.mxu0 0
        %378 = vmatprep.subr.bf16.mxu0 0
        %379 = vmatpush2.bf16.msra.mxu0 0
        %380 = vmatprep.subr.bf16.mxu0 0
        %381 = vmatpush2.bf16.msra.mxu0 0
        %382 = vmatprep.subr.bf16.mxu0 0
        %383 = vmatpush2.bf16.msra.mxu0 0
        %384 = vmatprep.mubr.bf16.mxu0 0
        %385 = vmatmul.mubr.bf16.gmra.mxu0 %v343
        %v386 = vpop.f32.mrf.mxu0
        %v387 = vadd.f32 %v339, %v386
        %v388 = vpop.f32.mrf.mxu0
        %v389 = vadd.f32 %v339, %v388
        %v390 = vpop.f32.mrf.mxu0
        %v391 = vpop.f32.mrf.mxu0
        %392 = vdwg.mxu0
        %v393 = vmax.f32 %v387, 0.0
        %v394 = vmax.f32 %v389, 0.0
        %v395 = vld [vmem:[%s3] sm:$0xf]
        %v396 = vld [vmem:[%s2] sm:$0xff]
        %v397 = vpack.c.bf16 %v393, %v393
        %v398 = vpack.c.bf16 %v394, %v394
        %400 = vset.pattern.permute.xlu0 1
        %401 = vperm.xlu0 %400, %v396
        %v402 = vpop.permute.xlu0 %401
        %vm404 = vcmask 64512
        %v406 = vsel %vm404, %v395, 0
        %vm408 = vcmask 1043456
        %v410 = vsel %vm408, %v397, 0
        %v413 = vsel %vm408, %v398, 0
        %415 = vmatprep.subr.bf16.mxu0 0
        %416 = vmatpush1.bf16.msra.mxu0 0
        %417 = vmatprep.subr.bf16.mxu0 0
        %418 = vmatpush1.bf16.msra.mxu0 0
        %419 = vmatprep.subr.bf16.mxu0 0
        %420 = vmatpush1.bf16.msra.mxu0 0
        %421 = vmatprep.subr.bf16.mxu0 0
        %422 = vmatpush1.bf16.msra.mxu0 0
        %423 = vmatprep.subr.bf16.mxu0 0
        %424 = vmatpush1.bf16.msra.mxu0 0
        %425 = vmatprep.subr.bf16.mxu0 0
        %426 = vmatpush1.bf16.msra.mxu0 0
        %427 = vmatprep.subr.bf16.mxu0 0
        %428 = vmatpush1.bf16.msra.mxu0 0
        %429 = vmatprep.subr.bf16.mxu0 %v413
        %430 = vmatpush1.bf16.msra.mxu0 %v410
        %431 = vmatprep.subr.bf16.mxu0 0
        %432 = vmatpush2.bf16.msra.mxu0 0
        %433 = vmatprep.subr.bf16.mxu0 0
        %434 = vmatpush2.bf16.msra.mxu0 0
        %435 = vmatprep.subr.bf16.mxu0 0
        %436 = vmatpush2.bf16.msra.mxu0 0
        %437 = vmatprep.subr.bf16.mxu0 0
        %438 = vmatpush2.bf16.msra.mxu0 0
        %439 = vmatprep.subr.bf16.mxu0 0
        %440 = vmatpush2.bf16.msra.mxu0 0
        %441 = vmatprep.subr.bf16.mxu0 0
        %442 = vmatpush2.bf16.msra.mxu0 0
        %443 = vmatprep.subr.bf16.mxu0 0
        %444 = vmatpush2.bf16.msra.mxu0 0
        %445 = vmatprep.subr.bf16.mxu0 0
        %446 = vmatpush2.bf16.msra.mxu0 0
        %447 = vmatprep.mubr.bf16.mxu0 0
        %448 = vmatmul.mubr.bf16.gmra.mxu0 %v406
        %v449 = vpop.f32.mrf.mxu0
        %v450 = vadd.f32 %v402, %v449
        %v451 = vpop.f32.mrf.mxu0
        %v452 = vadd.f32 %v402, %v451
        %v453 = vpop.f32.mrf.mxu0
        %v454 = vpop.f32.mrf.mxu0
        %455 = vdwg.mxu0
        %v456 = vmax.f32 %v450, 0.0
        %v457 = vmax.f32 %v452, 0.0
        %458 = vst [vmem:[%s302] sm:$0xff] %v456
        %459 = vst [vmem:[%s302 + $0x8] sm:$0xff] %v457
        %v460 = vld [vmem:[%s4] sm:$0xf]
        %v461 = vld [vmem:[%s4 + $0x4] sm:$0xf]
        %v462 = vld [vmem:[%s2] sm:$0xff]
        %v463 = vld [vmem:[%s2 + $0x8] sm:$0xff]
        %v464 = vpack.c.bf16 %v456, %v456
        %v465 = vpack.c.bf16 %v457, %v457
        %467 = vset.pattern.permute.xlu0 2
        %468 = vperm.xlu0 %467, %v462
        %v469 = vpop.permute.xlu0 %468
        %472 = vset.pattern.permute.xlu0 2
        %473 = vperm.xlu0 %472, %v463
        %v474 = vpop.permute.xlu0 %473
        %v478 = vunpack.c.l.b16 %v460
        %v479 = vunpack.c.l.b16 %v461
        %v480 = vpack.c.b16 %v479, %v478
        %v482 = vsel %vm404, %v480, 0
        %v485 = vsel %vm408, %v464, 0
        %v488 = vsel %vm408, %v465, 0
        %490 = vmatprep.subr.bf16.mxu0 0
        %491 = vmatpush1.bf16.msra.mxu0 0
        %492 = vmatprep.subr.bf16.mxu0 0
        %493 = vmatpush1.bf16.msra.mxu0 0
        %494 = vmatprep.subr.bf16.mxu0 0
        %495 = vmatpush1.bf16.msra.mxu0 0
        %496 = vmatprep.subr.bf16.mxu0 0
        %497 = vmatpush1.bf16.msra.mxu0 0
        %498 = vmatprep.subr.bf16.mxu0 0
        %499 = vmatpush1.bf16.msra.mxu0 0
        %500 = vmatprep.subr.bf16.mxu0 0
        %501 = vmatpush1.bf16.msra.mxu0 0
        %502 = vmatprep.subr.bf16.mxu0 0
        %503 = vmatpush1.bf16.msra.mxu0 0
        %504 = vmatprep.subr.bf16.mxu0 %v488
        %505 = vmatpush1.bf16.msra.mxu0 %v485
        %506 = vmatprep.subr.bf16.mxu0 0
        %507 = vmatpush2.bf16.msra.mxu0 0
        %508 = vmatprep.subr.bf16.mxu0 0
        %509 = vmatpush2.bf16.msra.mxu0 0
        %510 = vmatprep.subr.bf16.mxu0 0
        %511 = vmatpush2.bf16.msra.mxu0 0
        %512 = vmatprep.subr.bf16.mxu0 0
        %513 = vmatpush2.bf16.msra.mxu0 0
        %514 = vmatprep.subr.bf16.mxu0 0
        %515 = vmatpush2.bf16.msra.mxu0 0
        %516 = vmatprep.subr.bf16.mxu0 0
        %517 = vmatpush2.bf16.msra.mxu0 0
        %518 = vmatprep.subr.bf16.mxu0 0
        %519 = vmatpush2.bf16.msra.mxu0 0
        %520 = vmatprep.subr.bf16.mxu0 0
        %521 = vmatpush2.bf16.msra.mxu0 0
        %522 = vmatprep.mubr.bf16.mxu0 0
        %523 = vmatmul.mubr.bf16.gmra.mxu0 %v482
        %v524 = vpop.f32.mrf.mxu0
        %v525 = vadd.f32 %v469, %v524
        %v526 = vpop.f32.mrf.mxu0
        %v527 = vadd.f32 %v469, %v526
        %v528 = vpop.f32.mrf.mxu0
        %v529 = vadd.f32 %v474, %v528
        %v530 = vpop.f32.mrf.mxu0
        %v531 = vadd.f32 %v474, %v530
        %532 = vdwg.mxu0
        %v533 = vmax.f32 %v525, 0.0
        %v534 = vmax.f32 %v527, 0.0
        %v535 = vmax.f32 %v529, 0.0
        %v536 = vmax.f32 %v531, 0.0
        %v537 = vld [vmem:[%s5] sm:$0xf]
        %v538 = vld [vmem:[%s5 + $0x4] sm:$0xf]
        %v539 = vld [vmem:[%s5 + $0x8] sm:$0xf]
        %v540 = vld [vmem:[%s5 + $0xc] sm:$0xf]
        %v541 = vld [vmem:[%s5 + $0x10] sm:$0xf]
        %v542 = vld [vmem:[%s5 + $0x14] sm:$0xf]
        %v543 = vld [vmem:[%s5 + $0x18] sm:$0xf]
        %v544 = vld [vmem:[%s5 + $0x1c] sm:$0xf]
        %v545 = vld [vmem:[%s5 + $0x20] sm:$0xf]
        %v546 = vld [vmem:[%s5 + $0x24] sm:$0xf]
        %v547 = vld [vmem:[%s5 + $0x28] sm:$0xf]
        %v548 = vld [vmem:[%s5 + $0x2c] sm:$0xf]
        %v549 = vld [vmem:[%s5 + $0x30] sm:$0xf]
        %v550 = vld [vmem:[%s5 + $0x34] sm:$0xf]
        %v551 = vld [vmem:[%s5 + $0x38] sm:$0xf]
        %v552 = vld [vmem:[%s5 + $0x3c] sm:$0xf]
        %v553 = vld [vmem:[%s5 + $0x40] sm:$0xf]
        %v554 = vld [vmem:[%s5 + $0x44] sm:$0xf]
        %v555 = vld [vmem:[%s5 + $0x48] sm:$0xf]
        %v556 = vld [vmem:[%s5 + $0x4c] sm:$0xf]
        %v557 = vld [vmem:[%s5 + $0x50] sm:$0xf]
        %v558 = vld [vmem:[%s5 + $0x54] sm:$0xf]
        %v559 = vld [vmem:[%s5 + $0x58] sm:$0xf]
        %v560 = vld [vmem:[%s5 + $0x5c] sm:$0xf]
        %v561 = vld [vmem:[%s5 + $0x60] sm:$0xf]
        %v562 = vld [vmem:[%s5 + $0x64] sm:$0xf]
        %v563 = vld [vmem:[%s5 + $0x68] sm:$0xf]
        %v564 = vld [vmem:[%s5 + $0x6c] sm:$0xf]
        %v565 = vld [vmem:[%s5 + $0x70] sm:$0xf]
        %v566 = vld [vmem:[%s5 + $0x74] sm:$0xf]
        %v567 = vld [vmem:[%s5 + $0x78] sm:$0xf]
        %v568 = vld [vmem:[%s5 + $0x7c] sm:$0xf]
        %v569 = vpack.c.bf16 %v535, %v533
        %v570 = vpack.c.bf16 %v536, %v534
        %v603 = vunpack.c.l.b16 %v537
        %v604 = vunpack.c.l.b16 %v538
        %v605 = vunpack.c.l.b16 %v539
        %v606 = vunpack.c.l.b16 %v540
        %v607 = vunpack.c.l.b16 %v541
        %v608 = vunpack.c.l.b16 %v542
        %v609 = vunpack.c.l.b16 %v543
        %v610 = vunpack.c.l.b16 %v544
        %v611 = vunpack.c.l.b16 %v545
        %v612 = vunpack.c.l.b16 %v546
        %v613 = vunpack.c.l.b16 %v547
        %v614 = vunpack.c.l.b16 %v548
        %v615 = vunpack.c.l.b16 %v549
        %v616 = vunpack.c.l.b16 %v550
        %v617 = vunpack.c.l.b16 %v551
        %v618 = vunpack.c.l.b16 %v552
        %v619 = vunpack.c.l.b16 %v553
        %v620 = vunpack.c.l.b16 %v554
        %v621 = vunpack.c.l.b16 %v555
        %v622 = vunpack.c.l.b16 %v556
        %v623 = vunpack.c.l.b16 %v557
        %v624 = vunpack.c.l.b16 %v558
        %v625 = vunpack.c.l.b16 %v559
        %v626 = vunpack.c.l.b16 %v560
        %v627 = vunpack.c.l.b16 %v561
        %v628 = vunpack.c.l.b16 %v562
        %v629 = vunpack.c.l.b16 %v563
        %v630 = vunpack.c.l.b16 %v564
        %v631 = vunpack.c.l.b16 %v565
        %v632 = vunpack.c.l.b16 %v566
        %v633 = vunpack.c.l.b16 %v567
        %v634 = vunpack.c.l.b16 %v568
        %v635 = vpack.c.b16 %v604, %v603
        %v636 = vpack.c.b16 %v606, %v605
        %v637 = vpack.c.b16 %v608, %v607
        %v638 = vpack.c.b16 %v610, %v609
        %v639 = vpack.c.b16 %v612, %v611
        %v640 = vpack.c.b16 %v614, %v613
        %v641 = vpack.c.b16 %v616, %v615
        %v642 = vpack.c.b16 %v618, %v617
        %v643 = vpack.c.b16 %v620, %v619
        %v644 = vpack.c.b16 %v622, %v621
        %v645 = vpack.c.b16 %v624, %v623
        %v646 = vpack.c.b16 %v626, %v625
        %v647 = vpack.c.b16 %v628, %v627
        %v648 = vpack.c.b16 %v630, %v629
        %v649 = vpack.c.b16 %v632, %v631
        %v650 = vpack.c.b16 %v634, %v633
        %667 = vmatprep.subr.bf16.mxu0 0
        %668 = vmatpush1.bf16.msra.mxu0 %v642
        %669 = vmatprep.subr.bf16.mxu0 0
        %670 = vmatpush1.bf16.msra.mxu0 %v641
        %671 = vmatprep.subr.bf16.mxu0 0
        %672 = vmatpush1.bf16.msra.mxu0 %v640
        %673 = vmatprep.subr.bf16.mxu0 0
        %674 = vmatpush1.bf16.msra.mxu0 %v639
        %675 = vmatprep.subr.bf16.mxu0 0
        %676 = vmatpush1.bf16.msra.mxu0 %v638
        %677 = vmatprep.subr.bf16.mxu0 0
        %678 = vmatpush1.bf16.msra.mxu0 %v637
        %679 = vmatprep.subr.bf16.mxu0 0
        %680 = vmatpush1.bf16.msra.mxu0 %v636
        %681 = vmatprep.subr.bf16.mxu0 0
        %682 = vmatpush1.bf16.msra.mxu0 %v635
        %683 = vmatprep.subr.bf16.mxu0 0
        %684 = vmatpush2.bf16.msra.mxu0 %v650
        %685 = vmatprep.subr.bf16.mxu0 0
        %686 = vmatpush2.bf16.msra.mxu0 %v649
        %687 = vmatprep.subr.bf16.mxu0 0
        %688 = vmatpush2.bf16.msra.mxu0 %v648
        %689 = vmatprep.subr.bf16.mxu0 0
        %690 = vmatpush2.bf16.msra.mxu0 %v647
        %691 = vmatprep.subr.bf16.mxu0 0
        %692 = vmatpush2.bf16.msra.mxu0 %v646
        %693 = vmatprep.subr.bf16.mxu0 0
        %694 = vmatpush2.bf16.msra.mxu0 %v645
        %695 = vmatprep.subr.bf16.mxu0 0
        %696 = vmatpush2.bf16.msra.mxu0 %v644
        %697 = vmatprep.subr.bf16.mxu0 0
        %698 = vmatpush2.bf16.msra.mxu0 %v643
        %699 = vmatprep.mubr.bf16.mxu0 %v570
        %700 = vmatmul.mubr.bf16.gmra.mxu0 %v569
        %v701 = vpop.f32.mrf.mxu0
        %v702 = vadd.f32 0.0, %v701
        %v703 = vpop.f32.mrf.mxu0
        %v704 = vpop.f32.mrf.mxu0
        %v705 = vadd.f32 0.0, %v704
        %v706 = vpop.f32.mrf.mxu0
        %707 = vdwg.mxu0
        %vm708 = vcmask 523264
        %709 = vst.msk [vmem:[%s309] sm:$0xff] %vm708, %v702
        %710 = vst.msk [vmem:[%s309 + $0x8] sm:$0xff] %vm708, %v705
        %v711 = vsel %vm708, %v702, 0.0
        %712 = vadd.xlane.f32.xlu0 %v711
        %v713 = vpop.xlane.xlu0 %712
        %v714 = vsel %vm708, %v705, 0.0
        %715 = vadd.xlane.f32.xlu0 %v714
        %v716 = vpop.xlane.xlu0 %715
        %v717 = vrcp.pop 64.0
        %v718 = vmul.f32 %v713, %v717
        %v719 = vmul.f32 %v716, %v717
        %vm720 = vcmask 7168
        %721 = vst.msk [vmem:[%s326] sm:$0xff] %vm720, %v718
        %722 = vst.msk [vmem:[%s326 + $0x8] sm:$0xff] %vm720, %v719
        %s723 = sand.u32 %s165, 1
        %s724 = scalar_lea.sflag [#allocation3], %s723
        %s725 = sand.u32 %s165, 1
        %s726 = smul.addr %s725, 16
        %s727 = scalar_lea.vmem [#allocation2], %s726
        %s728 = sand.u32 %s191, 1
        %s729 = scalar_lea.sflag [#allocation5], %s728
        %s730 = sand.u32 %s191, 1
        %s731 = smul.addr %s730, 16
        %s732 = scalar_lea.vmem [#allocation4], %s731
        %p733 = scmp.lt.s32.totalorder %s26, 1
        %s734 = scalar_select %p733, %s26, 1
        %s735 = smul.addr %s734, 2
        %s736 = smul.addr %s735, 8
        %s737 = scalar_lea.vmem %s8, %s736
        // Predicated region
        $region45: #{tpu_custom_call.1} parent=43 // pred_check
          %p738 = pneg %p175
        $region46: #{tpu_custom_call.1} parent=43 // pred_check_branch
          %740 = sbr.rel (%p738) target = $region48
        $region47: #{tpu_custom_call.1} parent=43 // pred_region
          %s742 = ssub.s32 256, 256
          %743 = vsyncadd %s724, %s742
          %s744 = smul.addr %s26, 2
          %s745 = smul.addr %s744, 128
          %s746 = scalar_lea.hbm %s6, %s745
          %s748 = sshll.u32 %s727, 4
          %s749 = int_to_ptr.vmem [resolvable:$true] %s748
          %751 = dma.vmem_to_hbm [thread:$0]  %s749, 256, %s746, %s724
        $region48: #{tpu_custom_call.1} parent=43 // pred_fallthru
          _
        // Predicated region
        $region49: #{tpu_custom_call.1} parent=43 // pred_check
          %p752 = pneg %p201
        $region50: #{tpu_custom_call.1} parent=43 // pred_check_branch
          %754 = sbr.rel (%p752) target = $region52
        $region51: #{tpu_custom_call.1} parent=43 // pred_region
          %s756 = ssub.s32 256, 256
          %757 = vsyncadd %s729, %s756
          %s758 = smul.addr %s26, 2
          %s759 = smul.addr %s758, 128
          %s760 = scalar_lea.hbm %s7, %s759
          %s761 = sshll.u32 %s732, 4
          %s762 = int_to_ptr.vmem [resolvable:$true] %s761
          %767 = dma.vmem_to_hbm [thread:$0]  %s762, 256, %s760, %s729, 128, 128, 8
        $region52: #{tpu_custom_call.1} parent=43 // pred_fallthru
          _
        // Predicated region
        $region53: #{tpu_custom_call.1} parent=43 // pred_check
          %p768 = pneg %p227
        $region54: #{tpu_custom_call.1} parent=43 // pred_check_branch
          %770 = sbr.rel (%p768) target = $region56
        $region55: #{tpu_custom_call.1} parent=43 // pred_region
          _
        $region56: #{tpu_custom_call.1} parent=43 // pred_fallthru
          _
      $region44: #{tpu_custom_call.1} parent=5 // pred_fallthru
        _
      %p771 = scmp.le.s32.totalorder 2, %s21
      // Predicated region
      $region57: #{tpu_custom_call.1} parent=5 // pred_check
        %p772 = pneg %p771
      $region58: #{tpu_custom_call.1} parent=5 // pred_check_branch
        %774 = sbr.rel (%p772) target = $region60
      $region59: #{tpu_custom_call.1} parent=5 // pred_region
        %s775 = ssub.s32 %s21, 2
        // Predicated region
        $region61: #{tpu_custom_call.1} parent=59 // pred_check
          %p776 = pneg %p181
        $region62: #{tpu_custom_call.1} parent=59 // pred_check_branch
          %778 = sbr.rel (%p776) target = $region64
        $region63: #{tpu_custom_call.1} parent=59 // pred_region
          %s779 = sand.u32 %s166, 1
          %s780 = scalar_lea.sflag [#allocation3], %s779
          %s781 = sand.u32 %s166, 1
          %s782 = smul.addr %s781, 16
          %s783 = scalar_lea.vmem [#allocation2], %s782
          %784 = dma.done %s780, 256
        $region64: #{tpu_custom_call.1} parent=59 // pred_fallthru
          _
        // Predicated region
        $region65: #{tpu_custom_call.1} parent=59 // pred_check
          %p785 = pneg %p207
        $region66: #{tpu_custom_call.1} parent=59 // pred_check_branch
          %787 = sbr.rel (%p785) target = $region68
        $region67: #{tpu_custom_call.1} parent=59 // pred_region
          %s788 = sand.u32 %s192, 1
          %s789 = scalar_lea.sflag [#allocation5], %s788
          %s790 = sand.u32 %s192, 1
          %s791 = smul.addr %s790, 16
          %s792 = scalar_lea.vmem [#allocation4], %s791
          %793 = dma.done %s789, 256
        $region68: #{tpu_custom_call.1} parent=59 // pred_fallthru
          _
        // Predicated region
        $region69: #{tpu_custom_call.1} parent=59 // pred_check
          %p794 = pneg %p233
        $region70: #{tpu_custom_call.1} parent=59 // pred_check_branch
          %796 = sbr.rel (%p794) target = $region72
        $region71: #{tpu_custom_call.1} parent=59 // pred_region
          %p797 = scmp.lt.s32.totalorder %s27, 1
          %s798 = scalar_select %p797, %s27, 1
          %s799 = smul.addr %s798, 2
          %s800 = smul.addr %s799, 8
          %s801 = scalar_lea.vmem %s8, %s800
        $region72: #{tpu_custom_call.1} parent=59 // pred_fallthru
          _
      $region60: #{tpu_custom_call.1} parent=5 // pred_fallthru
        _
    $region6: #{tpu_custom_call.1} parent=1 // loop_footer
      %s25 = sadd.s32 1, %s21
    $region7: #{tpu_custom_call.1} parent=1 // loop_footer_branch
      %20 = sbr.rel target = $region3
    $region8: #{tpu_custom_call.1} parent=1 // loop_exit
      _
    %802 = vsyncpa [#allocation3], 1
    %s803 = scalar_lea.sflag [#allocation3], 1
    %804 = vsyncpa %s803, 1
    %805 = vsyncpa [#allocation5], 1
    %s806 = scalar_lea.sflag [#allocation5], 1
    %807 = vsyncpa %s806, 1

</llo_original>
